<compile_context>
chip_gen: v7x
topology: tpu7x:2x2x1
jax: 0.10.0
libtpu: 0.0.40
codegen_flags: <defaults>
</compile_context>

<pallas_src>
import numpy as np
import jax
import jax.numpy as jnp
from jax import lax
from jax.experimental import pallas as pl
from jax.experimental.pallas import tpu as pltpu

# ---- small shapes consistent with the module ----
B, C_IN, H, W = 2, 4, 16, 16
COND_DIM = 8
N_FILTER = 32
N_HIDDEN = 32
KSIZE = 3


def _make_kernel(Bn, C, Hh, Ww, F, KH, KW):
    HW = Hh * Ww
    BHW = Bn * HW
    KK = KH * KW
    taps = [(kh - KH // 2, kw - KW // 2) for kh in range(KH) for kw in range(KW)]

    def kernel(x_ref, w_ref, vmask_ref, bias_ref, o_ref, xs_ref):
        # Concatenate the batch images along the lane axis -> (C, B*HW) = (4, 512).
        x = jnp.concatenate([x_ref[b] for b in range(Bn)], axis=-1)

        # 9 taps: XLU roll (y[p] = x[p + dh*W + dw]) + border/seam mask, staged
        # into the (KK*C, B*HW) scratch with static row slices.
        for t, (dh, dw) in enumerate(taps):
            s = dh * Ww + dw
            sh = (-s) % BHW                     # non-negative equivalent shift
            xr = x if sh == 0 else pltpu.roll(x, shift=sh, axis=1)
            xs_ref[t * C:(t + 1) * C, :] = xr * vmask_ref[t:t + 1, :]

        # One fused MXU matmul: (F, KK*C) @ (KK*C, B*HW) -> (F, B*HW).
        acc = jnp.dot(w_ref[...], xs_ref[...], preferred_element_type=jnp.float32)

        # Add the per-batch bias column (conv bias + cond MLP) and store each
        # batch half as an unmasked lane-dense (F, HW) slab.
        for b in range(Bn):
            o_ref[b] = (acc[:, b * HW:(b + 1) * HW] + bias_ref[b]).astype(o_ref.dtype)

    return kernel


@jax.jit
def myconv_forward(x_nchw, cond_emb, params):
    w_conv, b_conv, w1, b1, w2, b2 = params
    Bn, C, Hh, Ww = x_nchw.shape
    F, _, KH, KW = w_conv.shape
    HW = Hh * Ww
    KK = KH * KW

    # Compile-time border-validity masks (numpy constant, KK * B*HW floats).
    hh = np.arange(HW) // Ww
    ww = np.arange(HW) % Ww
    vmask_img = np.zeros((KK, HW), np.float32)
    t = 0
    for kh in range(KH):
        for kw in range(KW):
            dh, dw = kh - KH // 2, kw - KW // 2
            ok = (hh + dh >= 0) & (hh + dh < Hh) & (ww + dw >= 0) & (ww + dw < Ww)
            vmask_img[t] = ok.astype(np.float32)
            t += 1
    vmask = jnp.asarray(np.tile(vmask_img, (1, Bn)))            # (KK, B*HW)

    # Metadata-only flatten of the NCHW image.
    x_flat = x_nchw.reshape(Bn, C, HW)                          # (B, C, HW)

    # Fused conv weights: column (t*C + c) = w_conv[f, c, kh, kw], t = kh*KW + kw.
    w_fused = jnp.transpose(w_conv, (0, 2, 3, 1)).reshape(F, KK * C)   # (F, KK*C)

    # Tiny cond MLP + conv bias computed in the jitted wrapper (XLA fuses it).
    h_cond = jnp.maximum(cond_emb @ w1 + b1, 0.0)
    bias = (b_conv[None, :] + h_cond @ w2 + b2).reshape(Bn, F, 1)      # (B, F, 1)

    kernel = _make_kernel(Bn, C, Hh, Ww, F, KH, KW)

    # TODO(synk): on v7x one could instead run grid=(B,) with "parallel" to put one
    # batch image per TensorCore; with this sub-microsecond kernel the single-step
    # batched layout chosen here is the safe default for v5e/v6e/v7x.
    out = pl.pallas_call(
        kernel,
        out_shape=jax.ShapeDtypeStruct((Bn, F, HW), x_nchw.dtype),
        in_specs=[
            pl.BlockSpec((Bn, C, HW), lambda: (0, 0, 0)),       # x (full block)
            pl.BlockSpec((F, KK * C), lambda: (0, 0)),          # fused conv weights
            pl.BlockSpec((KK, Bn * HW), lambda: (0, 0)),        # border masks
            pl.BlockSpec((Bn, F, 1), lambda: (0, 0, 0)),        # per-batch bias column
        ],
        out_specs=pl.BlockSpec((Bn, F, HW), lambda: (0, 0, 0)),
        scratch_shapes=[pltpu.VMEM((KK * C, Bn * HW), jnp.float32)],
    )(x_flat, w_fused, vmask, bias)

    return out.reshape(Bn, F, Hh, Ww)                           # metadata-only -> NCHW


# ---------------- reference (plain JAX) ----------------

def reference_forward(x_nchw, cond_emb, params):
    w_conv, b_conv, w1, b1, w2, b2 = params
    conv = lax.conv_general_dilated(
        x_nchw, w_conv, window_strides=(1, 1), padding="SAME",
        dimension_numbers=("NCHW", "OIHW", "NCHW"))
    conv = conv + b_conv[None, :, None, None]
    h = jnp.maximum(cond_emb @ w1 + b1, 0.0)
    c = h @ w2 + b2
    return conv + c[:, :, None, None]


if __name__ == "__main__":
    key = jax.random.PRNGKey(0)
    kx, kc, k1, k2, k3, k4, k5, k6 = jax.random.split(key, 8)

    x = jax.random.normal(kx, (B, C_IN, H, W), dtype=jnp.float32)
    cond_emb = jax.random.normal(kc, (B, COND_DIM), dtype=jnp.float32)

    # deterministic synthetic parameters (PyTorch-shaped)
    w_conv = 0.1 * jax.random.normal(k1, (N_FILTER, C_IN, KSIZE, KSIZE), jnp.float32)
    b_conv = 0.1 * jax.random.normal(k2, (N_FILTER,), jnp.float32)
    w1 = 0.1 * jax.random.normal(k3, (COND_DIM, N_HIDDEN), jnp.float32)
    b1 = 0.1 * jax.random.normal(k4, (N_HIDDEN,), jnp.float32)
    w2 = 0.1 * jax.random.normal(k5, (N_HIDDEN, N_FILTER), jnp.float32)
    b2 = 0.1 * jax.random.normal(k6, (N_FILTER,), jnp.float32)
    params = (w_conv, b_conv, w1, b1, w2, b2)

    out = jax.block_until_ready(myconv_forward(x, cond_emb, params))
    ref = jax.block_until_ready(reference_forward(x, cond_emb, params))

    assert out.shape == (B, N_FILTER, H, W), out.shape
    max_err = float(jnp.max(jnp.abs(out - ref)))
    assert jnp.allclose(out, ref, atol=1e-4, rtol=1e-4), max_err
    print("KERNEL_OK")
</pallas_src>

<mosaic_0001>
module attributes {stable_mosaic.version = 11 : i64} {
  func.func @kernel(%arg0: memref<2x4x256xf32, #tpu.memory_space<vmem>>, %arg1: memref<32x36xf32, #tpu.memory_space<vmem>>, %arg2: memref<9x512xf32, #tpu.memory_space<vmem>>, %arg3: memref<2x32x1xf32, #tpu.memory_space<vmem>>, %arg4: memref<2x32x256xf32, #tpu.memory_space<vmem>>, %arg5: memref<36x512xf32, #tpu.memory_space<vmem>>) attributes {dimension_semantics = [], scalar_prefetch = 0 : i64, scratch_operands = 1 : i64, tpu.core_type = #tpu.core_type<tc>} {
    %c0 = arith.constant 0 : index
    %c0_0 = arith.constant 0 : index
    %c0_1 = arith.constant 0 : index
    %0 = vector.load %arg0[%c0, %c0_0, %c0_1] : memref<2x4x256xf32, #tpu.memory_space<vmem>>, vector<1x4x256xf32>
    %1 = vector.shape_cast %0 : vector<1x4x256xf32> to vector<4x256xf32>
    %c1 = arith.constant 1 : index
    %c0_2 = arith.constant 0 : index
    %c0_3 = arith.constant 0 : index
    %2 = vector.load %arg0[%c1, %c0_2, %c0_3] : memref<2x4x256xf32, #tpu.memory_space<vmem>>, vector<1x4x256xf32>
    %3 = vector.shape_cast %2 : vector<1x4x256xf32> to vector<4x256xf32>
    %4 = tpu.concatenate %1, %3 in 1 : vector<4x256xf32>, vector<4x256xf32> -> vector<4x512xf32>
    %c17_i32 = arith.constant 17 : i32
    %5 = tpu.dynamic_rotate %4 by %c17_i32 dim 1 : vector<4x512xf32>, i32 -> vector<4x512xf32>
    %c0_4 = arith.constant 0 : index
    %c0_5 = arith.constant 0 : index
    %6 = vector.load %arg2[%c0_4, %c0_5] : memref<9x512xf32, #tpu.memory_space<vmem>>, vector<1x512xf32>
    %7 = vector.broadcast %6 : vector<1x512xf32> to vector<4x512xf32>
    %8 = arith.mulf %5, %7 : vector<4x512xf32>
    %c0_6 = arith.constant 0 : index
    %c0_7 = arith.constant 0 : index
    %9 = vector.load %arg5[%c0_6, %c0_7] : memref<36x512xf32, #tpu.memory_space<vmem>>, vector<4x512xf32>
    tpu.vector_store %arg5[%c0_6, %c0_7], %8 {strides = array<i32>} : memref<36x512xf32, #tpu.memory_space<vmem>>, vector<4x512xf32>,
    %c16_i32 = arith.constant 16 : i32
    %10 = tpu.dynamic_rotate %4 by %c16_i32 dim 1 : vector<4x512xf32>, i32 -> vector<4x512xf32>
    %c1_8 = arith.constant 1 : index
    %c0_9 = arith.constant 0 : index
    %11 = vector.load %arg2[%c1_8, %c0_9] : memref<9x512xf32, #tpu.memory_space<vmem>>, vector<1x512xf32>
    %12 = vector.broadcast %11 : vector<1x512xf32> to vector<4x512xf32>
    %13 = arith.mulf %10, %12 : vector<4x512xf32>
    %c4 = arith.constant 4 : index
    %c0_10 = arith.constant 0 : index
    %14 = vector.load %arg5[%c4, %c0_10] : memref<36x512xf32, #tpu.memory_space<vmem>>, vector<4x512xf32>
    tpu.vector_store %arg5[%c4, %c0_10], %13 {strides = array<i32>} : memref<36x512xf32, #tpu.memory_space<vmem>>, vector<4x512xf32>,
    %c15_i32 = arith.constant 15 : i32
    %15 = tpu.dynamic_rotate %4 by %c15_i32 dim 1 : vector<4x512xf32>, i32 -> vector<4x512xf32>
    %c2 = arith.constant 2 : index
    %c0_11 = arith.constant 0 : index
    %16 = vector.load %arg2[%c2, %c0_11] : memref<9x512xf32, #tpu.memory_space<vmem>>, vector<1x512xf32>
    %17 = vector.broadcast %16 : vector<1x512xf32> to vector<4x512xf32>
    %18 = arith.mulf %15, %17 : vector<4x512xf32>
    %c8 = arith.constant 8 : index
    %c0_12 = arith.constant 0 : index
    %19 = vector.load %arg5[%c8, %c0_12] : memref<36x512xf32, #tpu.memory_space<vmem>>, vector<4x512xf32>
    tpu.vector_store %arg5[%c8, %c0_12], %18 {strides = array<i32>} : memref<36x512xf32, #tpu.memory_space<vmem>>, vector<4x512xf32>,
    %c1_i32 = arith.constant 1 : i32
    %20 = tpu.dynamic_rotate %4 by %c1_i32 dim 1 : vector<4x512xf32>, i32 -> vector<4x512xf32>
    %c3 = arith.constant 3 : index
    %c0_13 = arith.constant 0 : index
    %21 = vector.load %arg2[%c3, %c0_13] : memref<9x512xf32, #tpu.memory_space<vmem>>, vector<1x512xf32>
    %22 = vector.broadcast %21 : vector<1x512xf32> to vector<4x512xf32>
    %23 = arith.mulf %20, %22 : vector<4x512xf32>
    %c12 = arith.constant 12 : index
    %c0_14 = arith.constant 0 : index
    %24 = vector.load %arg5[%c12, %c0_14] : memref<36x512xf32, #tpu.memory_space<vmem>>, vector<4x512xf32>
    tpu.vector_store %arg5[%c12, %c0_14], %23 {strides = array<i32>} : memref<36x512xf32, #tpu.memory_space<vmem>>, vector<4x512xf32>,
    %c4_15 = arith.constant 4 : index
    %c0_16 = arith.constant 0 : index
    %25 = vector.load %arg2[%c4_15, %c0_16] : memref<9x512xf32, #tpu.memory_space<vmem>>, vector<1x512xf32>
    %26 = vector.broadcast %25 : vector<1x512xf32> to vector<4x512xf32>
    %27 = arith.mulf %4, %26 : vector<4x512xf32>
    %c16 = arith.constant 16 : index
    %c0_17 = arith.constant 0 : index
    %28 = vector.load %arg5[%c16, %c0_17] : memref<36x512xf32, #tpu.memory_space<vmem>>, vector<4x512xf32>
    tpu.vector_store %arg5[%c16, %c0_17], %27 {strides = array<i32>} : memref<36x512xf32, #tpu.memory_space<vmem>>, vector<4x512xf32>,
    %c511_i32 = arith.constant 511 : i32
    %29 = tpu.dynamic_rotate %4 by %c511_i32 dim 1 : vector<4x512xf32>, i32 -> vector<4x512xf32>
    %c5 = arith.constant 5 : index
    %c0_18 = arith.constant 0 : index
    %30 = vector.load %arg2[%c5, %c0_18] : memref<9x512xf32, #tpu.memory_space<vmem>>, vector<1x512xf32>
    %31 = vector.broadcast %30 : vector<1x512xf32> to vector<4x512xf32>
    %32 = arith.mulf %29, %31 : vector<4x512xf32>
    %c20 = arith.constant 20 : index
    %c0_19 = arith.constant 0 : index
    %33 = vector.load %arg5[%c20, %c0_19] : memref<36x512xf32, #tpu.memory_space<vmem>>, vector<4x512xf32>
    tpu.vector_store %arg5[%c20, %c0_19], %32 {strides = array<i32>} : memref<36x512xf32, #tpu.memory_space<vmem>>, vector<4x512xf32>,
    %c497_i32 = arith.constant 497 : i32
    %34 = tpu.dynamic_rotate %4 by %c497_i32 dim 1 : vector<4x512xf32>, i32 -> vector<4x512xf32>
    %c6 = arith.constant 6 : index
    %c0_20 = arith.constant 0 : index
    %35 = vector.load %arg2[%c6, %c0_20] : memref<9x512xf32, #tpu.memory_space<vmem>>, vector<1x512xf32>
    %36 = vector.broadcast %35 : vector<1x512xf32> to vector<4x512xf32>
    %37 = arith.mulf %34, %36 : vector<4x512xf32>
    %c24 = arith.constant 24 : index
    %c0_21 = arith.constant 0 : index
    %38 = vector.load %arg5[%c24, %c0_21] : memref<36x512xf32, #tpu.memory_space<vmem>>, vector<4x512xf32>
    tpu.vector_store %arg5[%c24, %c0_21], %37 {strides = array<i32>} : memref<36x512xf32, #tpu.memory_space<vmem>>, vector<4x512xf32>,
    %c496_i32 = arith.constant 496 : i32
    %39 = tpu.dynamic_rotate %4 by %c496_i32 dim 1 : vector<4x512xf32>, i32 -> vector<4x512xf32>
    %c7 = arith.constant 7 : index
    %c0_22 = arith.constant 0 : index
    %40 = vector.load %arg2[%c7, %c0_22] : memref<9x512xf32, #tpu.memory_space<vmem>>, vector<1x512xf32>
    %41 = vector.broadcast %40 : vector<1x512xf32> to vector<4x512xf32>
    %42 = arith.mulf %39, %41 : vector<4x512xf32>
    %c28 = arith.constant 28 : index
    %c0_23 = arith.constant 0 : index
    %43 = vector.load %arg5[%c28, %c0_23] : memref<36x512xf32, #tpu.memory_space<vmem>>, vector<4x512xf32>
    tpu.vector_store %arg5[%c28, %c0_23], %42 {strides = array<i32>} : memref<36x512xf32, #tpu.memory_space<vmem>>, vector<4x512xf32>,
    %c495_i32 = arith.constant 495 : i32
    %44 = tpu.dynamic_rotate %4 by %c495_i32 dim 1 : vector<4x512xf32>, i32 -> vector<4x512xf32>
    %c8_24 = arith.constant 8 : index
    %c0_25 = arith.constant 0 : index
    %45 = vector.load %arg2[%c8_24, %c0_25] : memref<9x512xf32, #tpu.memory_space<vmem>>, vector<1x512xf32>
    %46 = vector.broadcast %45 : vector<1x512xf32> to vector<4x512xf32>
    %47 = arith.mulf %44, %46 : vector<4x512xf32>
    %c32 = arith.constant 32 : index
    %c0_26 = arith.constant 0 : index
    %48 = vector.load %arg5[%c32, %c0_26] : memref<36x512xf32, #tpu.memory_space<vmem>>, vector<4x512xf32>
    tpu.vector_store %arg5[%c32, %c0_26], %47 {strides = array<i32>} : memref<36x512xf32, #tpu.memory_space<vmem>>, vector<4x512xf32>,
    %c0_27 = arith.constant 0 : index
    %c0_28 = arith.constant 0 : index
    %49 = vector.load %arg1[%c0_27, %c0_28] : memref<32x36xf32, #tpu.memory_space<vmem>>, vector<32x36xf32>
    %c0_29 = arith.constant 0 : index
    %c0_30 = arith.constant 0 : index
    %50 = vector.load %arg5[%c0_29, %c0_30] : memref<36x512xf32, #tpu.memory_space<vmem>>, vector<36x512xf32>
    %cst = arith.constant dense<0.000000e+00> : vector<32x512xf32>
    %51 = tpu.matmul %49, %50, %cst {dimension_numbers = #tpu.dot_dimension_numbers<[1], [0], [0], [1], [0, 0, 1, 1], [], []>} : vector<32x36xf32>, vector<36x512xf32>, vector<32x512xf32> -> vector<32x512xf32>
    %52 = vector.extract_strided_slice %51 {offsets = [0, 0], sizes = [32, 256], strides = [1, 1]} : vector<32x512xf32> to vector<32x256xf32>
    %c0_31 = arith.constant 0 : index
    %c0_32 = arith.constant 0 : index
    %c0_33 = arith.constant 0 : index
    %53 = vector.load %arg3[%c0_31, %c0_32, %c0_33] : memref<2x32x1xf32, #tpu.memory_space<vmem>>, vector<1x32x1xf32>
    %54 = vector.shape_cast %53 : vector<1x32x1xf32> to vector<32x1xf32>
    %55 = vector.broadcast %54 : vector<32x1xf32> to vector<32x256xf32>
    %56 = arith.addf %52, %55 : vector<32x256xf32>
    %c0_34 = arith.constant 0 : index
    %c0_35 = arith.constant 0 : index
    %c0_36 = arith.constant 0 : index
    %57 = vector.load %arg4[%c0_34, %c0_35, %c0_36] : memref<2x32x256xf32, #tpu.memory_space<vmem>>, vector<1x32x256xf32>
    %58 = vector.shape_cast %57 : vector<1x32x256xf32> to vector<32x256xf32>
    %59 = vector.shape_cast %56 : vector<32x256xf32> to vector<1x32x256xf32>
    tpu.vector_store %arg4[%c0_34, %c0_35, %c0_36], %59 {strides = array<i32>} : memref<2x32x256xf32, #tpu.memory_space<vmem>>, vector<1x32x256xf32>,
    %60 = vector.extract_strided_slice %51 {offsets = [0, 256], sizes = [32, 256], strides = [1, 1]} : vector<32x512xf32> to vector<32x256xf32>
    %c1_37 = arith.constant 1 : index
    %c0_38 = arith.constant 0 : index
    %c0_39 = arith.constant 0 : index
    %61 = vector.load %arg3[%c1_37, %c0_38, %c0_39] : memref<2x32x1xf32, #tpu.memory_space<vmem>>, vector<1x32x1xf32>
    %62 = vector.shape_cast %61 : vector<1x32x1xf32> to vector<32x1xf32>
    %63 = vector.broadcast %62 : vector<32x1xf32> to vector<32x256xf32>
    %64 = arith.addf %60, %63 : vector<32x256xf32>
    %c1_40 = arith.constant 1 : index
    %c0_41 = arith.constant 0 : index
    %c0_42 = arith.constant 0 : index
    %65 = vector.load %arg4[%c1_40, %c0_41, %c0_42] : memref<2x32x256xf32, #tpu.memory_space<vmem>>, vector<1x32x256xf32>
    %66 = vector.shape_cast %65 : vector<1x32x256xf32> to vector<32x256xf32>
    %67 = vector.shape_cast %64 : vector<32x256xf32> to vector<1x32x256xf32>
    tpu.vector_store %arg4[%c1_40, %c0_41, %c0_42], %67 {strides = array<i32>} : memref<2x32x256xf32, #tpu.memory_space<vmem>>, vector<1x32x256xf32>,
    return
  }
}

</mosaic_0001>

<llo_original>
// kernel: myconv_forward.1
$region0: #{myconv_forward.1}
  #allocation0 [shape = 'u32[]', space=smem, size = 0x4, offset = 0x4, fixed_abs, tag = 'smem constant byte address 0x4 - core index']
  #allocation1 [shape = 'u32[144,128]{1,0:T(1,128)}', space=vmem, size = 0x12000, scoped, tag = 'internal scratch']
  #allocation2 [shape = 'f32[36,512]{1,0:T(8,128)}', space=vmem, size = 0x14000, scoped, tag = 'scratch operand']
  %s0 = inlined_call_operand.vmem [shape: f32[2,4,256], index: 0, kind: input, shape index: {}]
  %s1 = inlined_call_operand.vmem [shape: f32[32,36], index: 1, kind: input, shape index: {}]
  %s2 = inlined_call_operand.vmem [shape: f32[9,512], index: 2, kind: input, shape index: {}]
  %s3 = inlined_call_operand.vmem [shape: f32[2,32,1], index: 3, kind: input, shape index: {}]
  %s4 = inlined_call_operand.vmem [shape: f32[2,32,256], index: 4, kind: output, shape index: {}]
  %s5 = sld [smem:[#allocation0]]
  $region26: #{myconv_forward.1} parent=0
    _
  %s7 = ssub.s32 1, %s5
  %s8 = scalar_select 0, %s7, %s5
  // Predicated region
  $region2: #{myconv_forward.1} parent=0 // pred_check
    _
  $region3: #{myconv_forward.1} parent=0 // pred_check_branch
    %10 = sbr.rel (0) target = $region5
  $region4: #{myconv_forward.1} parent=0 // pred_region
    _
  $region5: #{myconv_forward.1} parent=0 // pred_fallthru
    _
  // Predicated region
  $region6: #{myconv_forward.1} parent=0 // pred_check
    _
  $region7: #{myconv_forward.1} parent=0 // pred_check_branch
    %12 = sbr.rel (0) target = $region9
  $region8: #{myconv_forward.1} parent=0 // pred_region
    _
  $region9: #{myconv_forward.1} parent=0 // pred_fallthru
    _
  // Predicated region
  $region10: #{myconv_forward.1} parent=0 // pred_check
    _
  $region11: #{myconv_forward.1} parent=0 // pred_check_branch
    %14 = sbr.rel (0) target = $region13
  $region12: #{myconv_forward.1} parent=0 // pred_region
    _
  $region13: #{myconv_forward.1} parent=0 // pred_fallthru
    _
  // Predicated region
  $region14: #{myconv_forward.1} parent=0 // pred_check
    _
  $region15: #{myconv_forward.1} parent=0 // pred_check_branch
    %16 = sbr.rel (0) target = $region17
  $region16: #{myconv_forward.1} parent=0 // pred_region
    _
  $region17: #{myconv_forward.1} parent=0 // pred_fallthru
    _
  %v17 = vld [vmem:[%s0] sm:$0xff]
  %s18 = scalar_lea.vmem %s0, 8
  %v19 = vld [vmem:[%s18] sm:$0xff]
  %v21 = vcombine.high %v17, %v17
  %v24 = vcombine.high %v19, %v19
  %26 = vrot.lane.b32.xlu0 %v17, 17
  %v27 = vpop.permute.xlu0 %26
  %28 = vrot.lane.b32.xlu0 %v21, 17
  %v29 = vpop.permute.xlu0 %28
  %30 = vrot.lane.b32.xlu0 %v19, 17
  %v31 = vpop.permute.xlu0 %30
  %32 = vrot.lane.b32.xlu0 %v24, 17
  %v33 = vpop.permute.xlu0 %32
  %v34 = vlaneseq
  %v35 = vand.u32 %v34, 127
  %vm36 = vcmp.lt.s32.totalorder %v35, 17
  %v37 = vsel %vm36, %v31, %v33
  %v38 = vsel %vm36, %v29, %v31
  %v39 = vsel %vm36, %v27, %v29
  %v40 = vsel %vm36, %v33, %v27
  %v41 = vld [vmem:[%s2] ss:$8 sm:$0xf]
  %v43 = vlaneseq
  %v44 = vshrl.u32 %v43, 7
  %v45 = vsub.s32 0, %v44
  %v46 = vrot.slane %v41, %v45
  %v47 = vlaneseq
  %v48 = vshrl.u32 %v47, 7
  %v49 = vsub.s32 1, %v48
  %v50 = vrot.slane %v41, %v49
  %v51 = vlaneseq
  %v52 = vshrl.u32 %v51, 7
  %v53 = vsub.s32 2, %v52
  %v54 = vrot.slane %v41, %v53
  %v55 = vlaneseq
  %v56 = vshrl.u32 %v55, 7
  %v57 = vsub.s32 3, %v56
  %v58 = vrot.slane %v41, %v57
  %v63 = vmul.f32 %v40, %v46
  %v64 = vmul.f32 %v39, %v50
  %v65 = vmul.f32 %v38, %v54
  %v66 = vmul.f32 %v37, %v58
  %67 = vst [vmem:[#allocation2] sm:$0xf] %v63
  %68 = vst [vmem:[#allocation2 + $0x8] sm:$0xf] %v64
  %69 = vst [vmem:[#allocation2 + $0x10] sm:$0xf] %v65
  %70 = vst [vmem:[#allocation2 + $0x18] sm:$0xf] %v66
  %71 = vrot.lane.b32.xlu0 %v17, 16
  %v72 = vpop.permute.xlu0 %71
  %73 = vrot.lane.b32.xlu0 %v21, 16
  %v74 = vpop.permute.xlu0 %73
  %75 = vrot.lane.b32.xlu0 %v19, 16
  %v76 = vpop.permute.xlu0 %75
  %77 = vrot.lane.b32.xlu0 %v24, 16
  %v78 = vpop.permute.xlu0 %77
  %vm79 = vcmp.lt.s32.totalorder %v35, 16
  %v80 = vsel %vm79, %v76, %v78
  %v81 = vsel %vm79, %v74, %v76
  %v82 = vsel %vm79, %v72, %v74
  %v83 = vsel %vm79, %v78, %v72
  %s84 = scalar_lea.vmem %s2, 1
  %v85 = vld [vmem:[%s84] ss:$8 sm:$0xf]
  %v87 = vlaneseq
  %v88 = vshrl.u32 %v87, 7
  %v89 = vsub.s32 0, %v88
  %v90 = vrot.slane %v85, %v89
  %v91 = vlaneseq
  %v92 = vshrl.u32 %v91, 7
  %v93 = vsub.s32 1, %v92
  %v94 = vrot.slane %v85, %v93
  %v95 = vlaneseq
  %v96 = vshrl.u32 %v95, 7
  %v97 = vsub.s32 2, %v96
  %v98 = vrot.slane %v85, %v97
  %v99 = vlaneseq
  %v100 = vshrl.u32 %v99, 7
  %v101 = vsub.s32 3, %v100
  %v102 = vrot.slane %v85, %v101
  %v107 = vmul.f32 %v83, %v90
  %v108 = vmul.f32 %v82, %v94
  %v109 = vmul.f32 %v81, %v98
  %v110 = vmul.f32 %v80, %v102
  %v115 = vrot.slane %v107, 4
  %v116 = vrot.slane %v108, 4
  %v117 = vrot.slane %v109, 4
  %v118 = vrot.slane %v110, 4
  %123 = vst [vmem:[#allocation2] sm:$0xf0] %v115
  %124 = vst [vmem:[#allocation2 + $0x8] sm:$0xf0] %v116
  %125 = vst [vmem:[#allocation2 + $0x10] sm:$0xf0] %v117
  %126 = vst [vmem:[#allocation2 + $0x18] sm:$0xf0] %v118
  %127 = vrot.lane.b32.xlu0 %v17, 15
  %v128 = vpop.permute.xlu0 %127
  %129 = vrot.lane.b32.xlu0 %v21, 15
  %v130 = vpop.permute.xlu0 %129
  %131 = vrot.lane.b32.xlu0 %v19, 15
  %v132 = vpop.permute.xlu0 %131
  %133 = vrot.lane.b32.xlu0 %v24, 15
  %v134 = vpop.permute.xlu0 %133
  %vm135 = vcmp.lt.s32.totalorder %v35, 15
  %v136 = vsel %vm135, %v132, %v134
  %v137 = vsel %vm135, %v130, %v132
  %v138 = vsel %vm135, %v128, %v130
  %v139 = vsel %vm135, %v134, %v128
  %s140 = scalar_lea.vmem %s2, 2
  %v141 = vld [vmem:[%s140] ss:$8 sm:$0xf]
  %v143 = vlaneseq
  %v144 = vshrl.u32 %v143, 7
  %v145 = vsub.s32 0, %v144
  %v146 = vrot.slane %v141, %v145
  %v147 = vlaneseq
  %v148 = vshrl.u32 %v147, 7
  %v149 = vsub.s32 1, %v148
  %v150 = vrot.slane %v141, %v149
  %v151 = vlaneseq
  %v152 = vshrl.u32 %v151, 7
  %v153 = vsub.s32 2, %v152
  %v154 = vrot.slane %v141, %v153
  %v155 = vlaneseq
  %v156 = vshrl.u32 %v155, 7
  %v157 = vsub.s32 3, %v156
  %v158 = vrot.slane %v141, %v157
  %v163 = vmul.f32 %v139, %v146
  %v164 = vmul.f32 %v138, %v150
  %v165 = vmul.f32 %v137, %v154
  %v166 = vmul.f32 %v136, %v158
  %167 = vst [vmem:[#allocation2 + $0x20] sm:$0xf] %v163
  %168 = vst [vmem:[#allocation2 + $0x28] sm:$0xf] %v164
  %169 = vst [vmem:[#allocation2 + $0x30] sm:$0xf] %v165
  %170 = vst [vmem:[#allocation2 + $0x38] sm:$0xf] %v166
  %171 = vrot.lane.b32.xlu0 %v17, 1
  %v172 = vpop.permute.xlu0 %171
  %173 = vrot.lane.b32.xlu0 %v21, 1
  %v174 = vpop.permute.xlu0 %173
  %175 = vrot.lane.b32.xlu0 %v19, 1
  %v176 = vpop.permute.xlu0 %175
  %177 = vrot.lane.b32.xlu0 %v24, 1
  %v178 = vpop.permute.xlu0 %177
  %vm179 = vcmp.lt.s32.totalorder %v35, 1
  %v180 = vsel %vm179, %v176, %v178
  %v181 = vsel %vm179, %v174, %v176
  %v182 = vsel %vm179, %v172, %v174
  %v183 = vsel %vm179, %v178, %v172
  %s184 = scalar_lea.vmem %s2, 3
  %v185 = vld [vmem:[%s184] ss:$8 sm:$0xf]
  %v187 = vlaneseq
  %v188 = vshrl.u32 %v187, 7
  %v189 = vsub.s32 0, %v188
  %v190 = vrot.slane %v185, %v189
  %v191 = vlaneseq
  %v192 = vshrl.u32 %v191, 7
  %v193 = vsub.s32 1, %v192
  %v194 = vrot.slane %v185, %v193
  %v195 = vlaneseq
  %v196 = vshrl.u32 %v195, 7
  %v197 = vsub.s32 2, %v196
  %v198 = vrot.slane %v185, %v197
  %v199 = vlaneseq
  %v200 = vshrl.u32 %v199, 7
  %v201 = vsub.s32 3, %v200
  %v202 = vrot.slane %v185, %v201
  %v207 = vmul.f32 %v183, %v190
  %v208 = vmul.f32 %v182, %v194
  %v209 = vmul.f32 %v181, %v198
  %v210 = vmul.f32 %v180, %v202
  %v215 = vrot.slane %v207, 4
  %v216 = vrot.slane %v208, 4
  %v217 = vrot.slane %v209, 4
  %v218 = vrot.slane %v210, 4
  %223 = vst [vmem:[#allocation2 + $0x20] sm:$0xf0] %v215
  %224 = vst [vmem:[#allocation2 + $0x28] sm:$0xf0] %v216
  %225 = vst [vmem:[#allocation2 + $0x30] sm:$0xf0] %v217
  %226 = vst [vmem:[#allocation2 + $0x38] sm:$0xf0] %v218
  %s227 = scalar_lea.vmem %s2, 4
  %v228 = vld [vmem:[%s227] ss:$8 sm:$0xf]
  %v230 = vlaneseq
  %v231 = vshrl.u32 %v230, 7
  %v232 = vsub.s32 0, %v231
  %v233 = vrot.slane %v228, %v232
  %v234 = vlaneseq
  %v235 = vshrl.u32 %v234, 7
  %v236 = vsub.s32 1, %v235
  %v237 = vrot.slane %v228, %v236
  %v238 = vlaneseq
  %v239 = vshrl.u32 %v238, 7
  %v240 = vsub.s32 2, %v239
  %v241 = vrot.slane %v228, %v240
  %v242 = vlaneseq
  %v243 = vshrl.u32 %v242, 7
  %v244 = vsub.s32 3, %v243
  %v245 = vrot.slane %v228, %v244
  %v250 = vmul.f32 %v17, %v233
  %v251 = vmul.f32 %v21, %v237
  %v252 = vmul.f32 %v19, %v241
  %v253 = vmul.f32 %v24, %v245
  %254 = vst [vmem:[#allocation2 + $0x40] sm:$0xf] %v250
  %255 = vst [vmem:[#allocation2 + $0x48] sm:$0xf] %v251
  %256 = vst [vmem:[#allocation2 + $0x50] sm:$0xf] %v252
  %257 = vst [vmem:[#allocation2 + $0x58] sm:$0xf] %v253
  %258 = vrot.lane.b32.xlu0 %v17, 127
  %v259 = vpop.permute.xlu0 %258
  %260 = vrot.lane.b32.xlu0 %v21, 127
  %v261 = vpop.permute.xlu0 %260
  %262 = vrot.lane.b32.xlu0 %v19, 127
  %v263 = vpop.permute.xlu0 %262
  %264 = vrot.lane.b32.xlu0 %v24, 127
  %v265 = vpop.permute.xlu0 %264
  %vm266 = vcmp.lt.s32.totalorder %v35, 127
  %v267 = vsel %vm266, %v263, %v265
  %v268 = vsel %vm266, %v261, %v263
  %v269 = vsel %vm266, %v259, %v261
  %v270 = vsel %vm266, %v265, %v259
  %s271 = scalar_lea.vmem %s2, 5
  %v272 = vld [vmem:[%s271] ss:$8 sm:$0xf]
  %v274 = vlaneseq
  %v275 = vshrl.u32 %v274, 7
  %v276 = vsub.s32 0, %v275
  %v277 = vrot.slane %v272, %v276
  %v278 = vlaneseq
  %v279 = vshrl.u32 %v278, 7
  %v280 = vsub.s32 1, %v279
  %v281 = vrot.slane %v272, %v280
  %v282 = vlaneseq
  %v283 = vshrl.u32 %v282, 7
  %v284 = vsub.s32 2, %v283
  %v285 = vrot.slane %v272, %v284
  %v286 = vlaneseq
  %v287 = vshrl.u32 %v286, 7
  %v288 = vsub.s32 3, %v287
  %v289 = vrot.slane %v272, %v288
  %v294 = vmul.f32 %v269, %v277
  %v295 = vmul.f32 %v268, %v281
  %v296 = vmul.f32 %v267, %v285
  %v297 = vmul.f32 %v270, %v289
  %v302 = vrot.slane %v294, 4
  %v303 = vrot.slane %v295, 4
  %v304 = vrot.slane %v296, 4
  %v305 = vrot.slane %v297, 4
  %310 = vst [vmem:[#allocation2 + $0x40] sm:$0xf0] %v302
  %311 = vst [vmem:[#allocation2 + $0x48] sm:$0xf0] %v303
  %312 = vst [vmem:[#allocation2 + $0x50] sm:$0xf0] %v304
  %313 = vst [vmem:[#allocation2 + $0x58] sm:$0xf0] %v305
  %314 = vrot.lane.b32.xlu0 %v17, 113
  %v315 = vpop.permute.xlu0 %314
  %316 = vrot.lane.b32.xlu0 %v21, 113
  %v317 = vpop.permute.xlu0 %316
  %318 = vrot.lane.b32.xlu0 %v19, 113
  %v319 = vpop.permute.xlu0 %318
  %320 = vrot.lane.b32.xlu0 %v24, 113
  %v321 = vpop.permute.xlu0 %320
  %vm322 = vcmp.lt.s32.totalorder %v35, 113
  %v323 = vsel %vm322, %v319, %v321
  %v324 = vsel %vm322, %v317, %v319
  %v325 = vsel %vm322, %v315, %v317
  %v326 = vsel %vm322, %v321, %v315
  %s327 = scalar_lea.vmem %s2, 6
  %v328 = vld [vmem:[%s327] ss:$8 sm:$0xf]
  %v330 = vlaneseq
  %v331 = vshrl.u32 %v330, 7
  %v332 = vsub.s32 0, %v331
  %v333 = vrot.slane %v328, %v332
  %v334 = vlaneseq
  %v335 = vshrl.u32 %v334, 7
  %v336 = vsub.s32 1, %v335
  %v337 = vrot.slane %v328, %v336
  %v338 = vlaneseq
  %v339 = vshrl.u32 %v338, 7
  %v340 = vsub.s32 2, %v339
  %v341 = vrot.slane %v328, %v340
  %v342 = vlaneseq
  %v343 = vshrl.u32 %v342, 7
  %v344 = vsub.s32 3, %v343
  %v345 = vrot.slane %v328, %v344
  %v350 = vmul.f32 %v325, %v333
  %v351 = vmul.f32 %v324, %v337
  %v352 = vmul.f32 %v323, %v341
  %v353 = vmul.f32 %v326, %v345
  %354 = vst [vmem:[#allocation2 + $0x60] sm:$0xf] %v350
  %355 = vst [vmem:[#allocation2 + $0x68] sm:$0xf] %v351
  %356 = vst [vmem:[#allocation2 + $0x70] sm:$0xf] %v352
  %357 = vst [vmem:[#allocation2 + $0x78] sm:$0xf] %v353
  %358 = vrot.lane.b32.xlu0 %v17, 112
  %v359 = vpop.permute.xlu0 %358
  %360 = vrot.lane.b32.xlu0 %v21, 112
  %v361 = vpop.permute.xlu0 %360
  %362 = vrot.lane.b32.xlu0 %v19, 112
  %v363 = vpop.permute.xlu0 %362
  %364 = vrot.lane.b32.xlu0 %v24, 112
  %v365 = vpop.permute.xlu0 %364
  %vm366 = vcmp.lt.s32.totalorder %v35, 112
  %v367 = vsel %vm366, %v363, %v365
  %v368 = vsel %vm366, %v361, %v363
  %v369 = vsel %vm366, %v359, %v361
  %v370 = vsel %vm366, %v365, %v359
  %s371 = scalar_lea.vmem %s2, 7
  %v372 = vld [vmem:[%s371] ss:$8 sm:$0xf]
  %v374 = vlaneseq
  %v375 = vshrl.u32 %v374, 7
  %v376 = vsub.s32 0, %v375
  %v377 = vrot.slane %v372, %v376
  %v378 = vlaneseq
  %v379 = vshrl.u32 %v378, 7
  %v380 = vsub.s32 1, %v379
  %v381 = vrot.slane %v372, %v380
  %v382 = vlaneseq
  %v383 = vshrl.u32 %v382, 7
  %v384 = vsub.s32 2, %v383
  %v385 = vrot.slane %v372, %v384
  %v386 = vlaneseq
  %v387 = vshrl.u32 %v386, 7
  %v388 = vsub.s32 3, %v387
  %v389 = vrot.slane %v372, %v388
  %v394 = vmul.f32 %v369, %v377
  %v395 = vmul.f32 %v368, %v381
  %v396 = vmul.f32 %v367, %v385
  %v397 = vmul.f32 %v370, %v389
  %v402 = vrot.slane %v394, 4
  %v403 = vrot.slane %v395, 4
  %v404 = vrot.slane %v396, 4
  %v405 = vrot.slane %v397, 4
  %410 = vst [vmem:[#allocation2 + $0x60] sm:$0xf0] %v402
  %411 = vst [vmem:[#allocation2 + $0x68] sm:$0xf0] %v403
  %412 = vst [vmem:[#allocation2 + $0x70] sm:$0xf0] %v404
  %413 = vst [vmem:[#allocation2 + $0x78] sm:$0xf0] %v405
  %414 = vrot.lane.b32.xlu0 %v17, 111
  %v415 = vpop.permute.xlu0 %414
  %416 = vrot.lane.b32.xlu0 %v21, 111
  %v417 = vpop.permute.xlu0 %416
  %418 = vrot.lane.b32.xlu0 %v19, 111
  %v419 = vpop.permute.xlu0 %418
  %420 = vrot.lane.b32.xlu0 %v24, 111
  %v421 = vpop.permute.xlu0 %420
  %vm422 = vcmp.lt.s32.totalorder %v35, 111
  %v423 = vsel %vm422, %v419, %v421
  %v424 = vsel %vm422, %v417, %v419
  %v425 = vsel %vm422, %v415, %v417
  %v426 = vsel %vm422, %v421, %v415
  %s427 = scalar_lea.vmem %s2, 32
  %v428 = vld [vmem:[%s427] ss:$8 sm:$0xf]
  %v430 = vlaneseq
  %v431 = vshrl.u32 %v430, 7
  %v432 = vsub.s32 0, %v431
  %v433 = vrot.slane %v428, %v432
  %v434 = vlaneseq
  %v435 = vshrl.u32 %v434, 7
  %v436 = vsub.s32 1, %v435
  %v437 = vrot.slane %v428, %v436
  %v438 = vlaneseq
  %v439 = vshrl.u32 %v438, 7
  %v440 = vsub.s32 2, %v439
  %v441 = vrot.slane %v428, %v440
  %v442 = vlaneseq
  %v443 = vshrl.u32 %v442, 7
  %v444 = vsub.s32 3, %v443
  %v445 = vrot.slane %v428, %v444
  %v450 = vmul.f32 %v425, %v433
  %v451 = vmul.f32 %v424, %v437
  %v452 = vmul.f32 %v423, %v441
  %v453 = vmul.f32 %v426, %v445
  %454 = vst [vmem:[#allocation2 + $0x80] sm:$0xf] %v450
  %455 = vst [vmem:[#allocation2 + $0x88] sm:$0xf] %v451
  %456 = vst [vmem:[#allocation2 + $0x90] sm:$0xf] %v452
  %457 = vst [vmem:[#allocation2 + $0x98] sm:$0xf] %v453
  %v458 = vld [vmem:[%s1] sm:$0xff]
  %v459 = vld [vmem:[%s1 + $0x8] sm:$0xff]
  %v460 = vld [vmem:[%s1 + $0x10] sm:$0xff]
  %v461 = vld [vmem:[%s1 + $0x18] sm:$0xff]
  %v462 = vld [vmem:[#allocation2] sm:$0xff]
  %v463 = vld [vmem:[#allocation2 + $0x8] sm:$0xff]
  %v464 = vld [vmem:[#allocation2 + $0x10] sm:$0xff]
  %v465 = vld [vmem:[#allocation2 + $0x18] sm:$0xff]
  %v466 = vld [vmem:[#allocation2 + $0x20] sm:$0xff]
  %v467 = vld [vmem:[#allocation2 + $0x28] sm:$0xff]
  %v468 = vld [vmem:[#allocation2 + $0x30] sm:$0xff]
  %v469 = vld [vmem:[#allocation2 + $0x38] sm:$0xff]
  %v470 = vld [vmem:[#allocation2 + $0x40] sm:$0xff]
  %v471 = vld [vmem:[#allocation2 + $0x48] sm:$0xff]
  %v472 = vld [vmem:[#allocation2 + $0x50] sm:$0xff]
  %v473 = vld [vmem:[#allocation2 + $0x58] sm:$0xff]
  %v474 = vld [vmem:[#allocation2 + $0x60] sm:$0xff]
  %v475 = vld [vmem:[#allocation2 + $0x68] sm:$0xff]
  %v476 = vld [vmem:[#allocation2 + $0x70] sm:$0xff]
  %v477 = vld [vmem:[#allocation2 + $0x78] sm:$0xff]
  %v478 = vld [vmem:[#allocation2 + $0x80] sm:$0xf]
  %v479 = vld [vmem:[#allocation2 + $0x88] sm:$0xf]
  %v480 = vld [vmem:[#allocation2 + $0x90] sm:$0xf]
  %v481 = vld [vmem:[#allocation2 + $0x98] sm:$0xf]
  %vm482 = vcmask 293888
  %v484 = vsel %vm482, %v458, 0
  %v487 = vsel %vm482, %v459, 0
  %v490 = vsel %vm482, %v460, 0
  %v493 = vsel %vm482, %v461, 0
  %vm495 = vcmask 1043456
  %v497 = vsel %vm495, %v478, 0
  %v500 = vsel %vm495, %v479, 0
  %v503 = vsel %vm495, %v480, 0
  %v506 = vsel %vm495, %v481, 0
  %508 = vmatprep.subr.mxu0 %v463
  %509 = vmatpush1.msra.mxu0 %v462
  %510 = vmatprep.subr.mxu0 %v467
  %511 = vmatpush1.msra.mxu0 %v466
  %512 = vmatprep.subr.mxu0 %v471
  %513 = vmatpush1.msra.mxu0 %v470
  %514 = vmatprep.subr.mxu0 %v475
  %515 = vmatpush1.msra.mxu0 %v474
  %516 = vmatprep.subr.mxu0 %v500
  %517 = vmatpush1.msra.mxu0 %v497
  %518 = vmatprep.subr.mxu0 0.0
  %519 = vmatpush1.msra.mxu0 0.0
  %520 = vmatprep.subr.mxu0 0.0
  %521 = vmatpush1.msra.mxu0 0.0
  %522 = vmatprep.subr.mxu0 0.0
  %523 = vmatpush1.msra.mxu0 0.0
  %524 = vmatprep.subr.mxu0 0.0
  %525 = vmatpush1.msra.mxu0 0.0
  %526 = vmatprep.subr.mxu0 0.0
  %527 = vmatpush1.msra.mxu0 0.0
  %528 = vmatprep.subr.mxu0 0.0
  %529 = vmatpush1.msra.mxu0 0.0
  %530 = vmatprep.subr.mxu0 0.0
  %531 = vmatpush1.msra.mxu0 0.0
  %532 = vmatprep.subr.mxu0 0.0
  %533 = vmatpush1.msra.mxu0 0.0
  %534 = vmatprep.subr.mxu0 0.0
  %535 = vmatpush1.msra.mxu0 0.0
  %536 = vmatprep.subr.mxu0 0.0
  %537 = vmatpush1.msra.mxu0 0.0
  %538 = vmatprep.subr.mxu0 0.0
  %539 = vmatpush1.msra.mxu0 0.0
  %540 = vmatprep.subr.mxu0 0.0
  %541 = vmatpush1.msra.mxu0 0.0
  %542 = vmatprep.subr.mxu0 0.0
  %543 = vmatpush1.msra.mxu0 0.0
  %544 = vmatprep.subr.mxu0 0.0
  %545 = vmatpush1.msra.mxu0 0.0
  %546 = vmatprep.subr.mxu0 0.0
  %547 = vmatpush1.msra.mxu0 0.0
  %548 = vmatprep.subr.mxu0 0.0
  %549 = vmatpush1.msra.mxu0 0.0
  %550 = vmatprep.subr.mxu0 0.0
  %551 = vmatpush1.msra.mxu0 0.0
  %552 = vmatprep.subr.mxu0 0.0
  %553 = vmatpush1.msra.mxu0 0.0
  %554 = vmatprep.subr.mxu0 0.0
  %555 = vmatpush1.msra.mxu0 0.0
  %556 = vmatprep.subr.mxu0 0.0
  %557 = vmatpush1.msra.mxu0 0.0
  %558 = vmatprep.subr.mxu0 0.0
  %559 = vmatpush1.msra.mxu0 0.0
  %560 = vmatprep.subr.mxu0 0.0
  %561 = vmatpush1.msra.mxu0 0.0
  %562 = vmatprep.subr.mxu0 0.0
  %563 = vmatpush1.msra.mxu0 0.0
  %564 = vmatprep.subr.mxu0 0.0
  %565 = vmatpush1.msra.mxu0 0.0
  %566 = vmatprep.subr.mxu0 0.0
  %567 = vmatpush1.msra.mxu0 0.0
  %568 = vmatprep.subr.mxu0 0.0
  %569 = vmatpush1.msra.mxu0 0.0
  %570 = vmatprep.subr.mxu0 0.0
  %571 = vmatpush1.msra.mxu0 0.0
  %572 = vmatprep.mubr.f32.mxu0 0.0
  %573 = vmatmul.mubr.f32.gmra.mrb[0].mxu0 %v484
  %v574 = vpop.f32.mrb[0].mxu0
  %v575 = vadd.f32 0.0, %v574
  %v576 = vpop.f32.mrb[0].mxu0
  %v577 = vadd.f32 0.0, %v576
  %578 = vmatprep.mubr.f32.mxu0 0.0
  %579 = vmatmul.mubr.f32.gmra.mrb[0].mxu0 %v487
  %v580 = vpop.f32.mrb[0].mxu0
  %v581 = vadd.f32 0.0, %v580
  %v582 = vpop.f32.mrb[0].mxu0
  %v583 = vadd.f32 0.0, %v582
  %584 = vmatprep.mubr.f32.mxu0 0.0
  %585 = vmatmul.mubr.f32.gmra.mrb[0].mxu0 %v490
  %v586 = vpop.f32.mrb[0].mxu0
  %v587 = vadd.f32 0.0, %v586
  %v588 = vpop.f32.mrb[0].mxu0
  %v589 = vadd.f32 0.0, %v588
  %590 = vmatprep.mubr.f32.mxu0 0.0
  %591 = vmatmul.mubr.f32.gmra.mrb[0].mxu0 %v493
  %v592 = vpop.f32.mrb[0].mxu0
  %v593 = vadd.f32 0.0, %v592
  %v594 = vpop.f32.mrb[0].mxu0
  %v595 = vadd.f32 0.0, %v594
  %596 = vdwg.mxu0
  %597 = vmatprep.subr.mxu0 %v465
  %598 = vmatpush1.msra.mxu0 %v464
  %599 = vmatprep.subr.mxu0 %v469
  %600 = vmatpush1.msra.mxu0 %v468
  %601 = vmatprep.subr.mxu0 %v473
  %602 = vmatpush1.msra.mxu0 %v472
  %603 = vmatprep.subr.mxu0 %v477
  %604 = vmatpush1.msra.mxu0 %v476
  %605 = vmatprep.subr.mxu0 %v506
  %606 = vmatpush1.msra.mxu0 %v503
  %607 = vmatprep.subr.mxu0 0.0
  %608 = vmatpush1.msra.mxu0 0.0
  %609 = vmatprep.subr.mxu0 0.0
  %610 = vmatpush1.msra.mxu0 0.0
  %611 = vmatprep.subr.mxu0 0.0
  %612 = vmatpush1.msra.mxu0 0.0
  %613 = vmatprep.subr.mxu0 0.0
  %614 = vmatpush1.msra.mxu0 0.0
  %615 = vmatprep.subr.mxu0 0.0
  %616 = vmatpush1.msra.mxu0 0.0
  %617 = vmatprep.subr.mxu0 0.0
  %618 = vmatpush1.msra.mxu0 0.0
  %619 = vmatprep.subr.mxu0 0.0
  %620 = vmatpush1.msra.mxu0 0.0
  %621 = vmatprep.subr.mxu0 0.0
  %622 = vmatpush1.msra.mxu0 0.0
  %623 = vmatprep.subr.mxu0 0.0
  %624 = vmatpush1.msra.mxu0 0.0
  %625 = vmatprep.subr.mxu0 0.0
  %626 = vmatpush1.msra.mxu0 0.0
  %627 = vmatprep.subr.mxu0 0.0
  %628 = vmatpush1.msra.mxu0 0.0
  %629 = vmatprep.subr.mxu0 0.0
  %630 = vmatpush1.msra.mxu0 0.0
  %631 = vmatprep.subr.mxu0 0.0
  %632 = vmatpush1.msra.mxu0 0.0
  %633 = vmatprep.subr.mxu0 0.0
  %634 = vmatpush1.msra.mxu0 0.0
  %635 = vmatprep.subr.mxu0 0.0
  %636 = vmatpush1.msra.mxu0 0.0
  %637 = vmatprep.subr.mxu0 0.0
  %638 = vmatpush1.msra.mxu0 0.0
  %639 = vmatprep.subr.mxu0 0.0
  %640 = vmatpush1.msra.mxu0 0.0
  %641 = vmatprep.subr.mxu0 0.0
  %642 = vmatpush1.msra.mxu0 0.0
  %643 = vmatprep.subr.mxu0 0.0
  %644 = vmatpush1.msra.mxu0 0.0
  %645 = vmatprep.subr.mxu0 0.0
  %646 = vmatpush1.msra.mxu0 0.0
  %647 = vmatprep.subr.mxu0 0.0
  %648 = vmatpush1.msra.mxu0 0.0
  %649 = vmatprep.subr.mxu0 0.0
  %650 = vmatpush1.msra.mxu0 0.0
  %651 = vmatprep.subr.mxu0 0.0
  %652 = vmatpush1.msra.mxu0 0.0
  %653 = vmatprep.subr.mxu0 0.0
  %654 = vmatpush1.msra.mxu0 0.0
  %655 = vmatprep.subr.mxu0 0.0
  %656 = vmatpush1.msra.mxu0 0.0
  %657 = vmatprep.subr.mxu0 0.0
  %658 = vmatpush1.msra.mxu0 0.0
  %659 = vmatprep.subr.mxu0 0.0
  %660 = vmatpush1.msra.mxu0 0.0
  %661 = vmatprep.mubr.f32.mxu0 0.0
  %662 = vmatmul.mubr.f32.gmra.mrb[0].mxu0 %v484
  %v663 = vpop.f32.mrb[0].mxu0
  %v664 = vadd.f32 0.0, %v663
  %v665 = vpop.f32.mrb[0].mxu0
  %v666 = vadd.f32 0.0, %v665
  %667 = vmatprep.mubr.f32.mxu0 0.0
  %668 = vmatmul.mubr.f32.gmra.mrb[0].mxu0 %v487
  %v669 = vpop.f32.mrb[0].mxu0
  %v670 = vadd.f32 0.0, %v669
  %v671 = vpop.f32.mrb[0].mxu0
  %v672 = vadd.f32 0.0, %v671
  %673 = vmatprep.mubr.f32.mxu0 0.0
  %674 = vmatmul.mubr.f32.gmra.mrb[0].mxu0 %v490
  %v675 = vpop.f32.mrb[0].mxu0
  %v676 = vadd.f32 0.0, %v675
  %v677 = vpop.f32.mrb[0].mxu0
  %v678 = vadd.f32 0.0, %v677
  %679 = vmatprep.mubr.f32.mxu0 0.0
  %680 = vmatmul.mubr.f32.gmra.mrb[0].mxu0 %v493
  %v681 = vpop.f32.mrb[0].mxu0
  %v682 = vadd.f32 0.0, %v681
  %v683 = vpop.f32.mrb[0].mxu0
  %v684 = vadd.f32 0.0, %v683
  %685 = vdwg.mxu0
  %v686 = vld [vmem:[%s3] sm:$0xff]
  %v687 = vld [vmem:[%s3 + $0x8] sm:$0xff]
  %v688 = vld [vmem:[%s3 + $0x10] sm:$0xff]
  %v689 = vld [vmem:[%s3 + $0x18] sm:$0xff]
  %691 = vset.pattern.permute.xlu0 0
  %692 = vperm.xlu0 %691, %v686
  %v693 = vpop.permute.xlu0 %692
  %696 = vset.pattern.permute.xlu0 0
  %697 = vperm.xlu0 %696, %v687
  %v698 = vpop.permute.xlu0 %697
  %701 = vset.pattern.permute.xlu0 0
  %702 = vperm.xlu0 %701, %v688
  %v703 = vpop.permute.xlu0 %702
  %706 = vset.pattern.permute.xlu0 0
  %707 = vperm.xlu0 %706, %v689
  %v708 = vpop.permute.xlu0 %707
  %v710 = vadd.f32 %v575, %v693
  %v711 = vadd.f32 %v577, %v693
  %v712 = vadd.f32 %v581, %v698
  %v713 = vadd.f32 %v583, %v698
  %v714 = vadd.f32 %v587, %v703
  %v715 = vadd.f32 %v589, %v703
  %v716 = vadd.f32 %v593, %v708
  %v717 = vadd.f32 %v595, %v708
  %718 = vst [vmem:[%s4] sm:$0xff] %v710
  %719 = vst [vmem:[%s4 + $0x8] sm:$0xff] %v711
  %720 = vst [vmem:[%s4 + $0x10] sm:$0xff] %v712
  %721 = vst [vmem:[%s4 + $0x18] sm:$0xff] %v713
  %722 = vst [vmem:[%s4 + $0x20] sm:$0xff] %v714
  %723 = vst [vmem:[%s4 + $0x28] sm:$0xff] %v715
  %724 = vst [vmem:[%s4 + $0x30] sm:$0xff] %v716
  %725 = vst [vmem:[%s4 + $0x38] sm:$0xff] %v717
  %s726 = scalar_lea.vmem %s3, 32
  %v727 = vld [vmem:[%s726] sm:$0xff]
  %v728 = vld [vmem:[%s726 + $0x8] sm:$0xff]
  %v729 = vld [vmem:[%s726 + $0x10] sm:$0xff]
  %v730 = vld [vmem:[%s726 + $0x18] sm:$0xff]
  %732 = vset.pattern.permute.xlu0 0
  %733 = vperm.xlu0 %732, %v727
  %v734 = vpop.permute.xlu0 %733
  %737 = vset.pattern.permute.xlu0 0
  %738 = vperm.xlu0 %737, %v728
  %v739 = vpop.permute.xlu0 %738
  %742 = vset.pattern.permute.xlu0 0
  %743 = vperm.xlu0 %742, %v729
  %v744 = vpop.permute.xlu0 %743
  %747 = vset.pattern.permute.xlu0 0
  %748 = vperm.xlu0 %747, %v730
  %v749 = vpop.permute.xlu0 %748
  %v751 = vadd.f32 %v664, %v734
  %v752 = vadd.f32 %v666, %v734
  %v753 = vadd.f32 %v670, %v739
  %v754 = vadd.f32 %v672, %v739
  %v755 = vadd.f32 %v676, %v744
  %v756 = vadd.f32 %v678, %v744
  %v757 = vadd.f32 %v682, %v749
  %v758 = vadd.f32 %v684, %v749
  %s759 = scalar_lea.vmem %s4, 64
  %760 = vst [vmem:[%s759] sm:$0xff] %v751
  %761 = vst [vmem:[%s759 + $0x8] sm:$0xff] %v752
  %762 = vst [vmem:[%s759 + $0x10] sm:$0xff] %v753
  %763 = vst [vmem:[%s759 + $0x18] sm:$0xff] %v754
  %764 = vst [vmem:[%s759 + $0x20] sm:$0xff] %v755
  %765 = vst [vmem:[%s759 + $0x28] sm:$0xff] %v756
  %766 = vst [vmem:[%s759 + $0x30] sm:$0xff] %v757
  %767 = vst [vmem:[%s759 + $0x38] sm:$0xff] %v758
  // Predicated region
  $region18: #{myconv_forward.1} parent=0 // pred_check
    _
  $region19: #{myconv_forward.1} parent=0 // pred_check_branch
    %769 = sbr.rel (0) target = $region21
  $region20: #{myconv_forward.1} parent=0 // pred_region
    _
  $region21: #{myconv_forward.1} parent=0 // pred_fallthru
    _
  // Predicated region
  $region22: #{myconv_forward.1} parent=0 // pred_check
    _
  $region23: #{myconv_forward.1} parent=0 // pred_check_branch
    %771 = sbr.rel (0) target = $region25
  $region24: #{myconv_forward.1} parent=0 // pred_region
    _
  $region25: #{myconv_forward.1} parent=0 // pred_fallthru
    _

</llo_original>
